<compile_context>
chip_gen: v7x
topology: tpu7x:2x2x1
jax: 0.10.0
libtpu: 0.0.40
codegen_flags: <defaults>
</compile_context>

<pallas_src>
import functools
import math

import jax
import jax.numpy as jnp
from jax import lax
from jax.experimental import pallas as pl
from jax.experimental.pallas import tpu as pltpu


def _round_up(v, m):
    return ((v + m - 1) // m) * m


def _pick_tile(dim_128, max_tile, min_blocks=1):
    """dim_128 is a multiple of 128. Return the largest tile (multiple of 128)
    that divides dim_128, is <= max_tile and yields >= min_blocks blocks
    (best effort: falls back to 128 / fewer blocks if impossible)."""
    units = dim_128 // 128
    best = 128
    for d in range(1, units + 1):
        if units % d == 0 and d * 128 <= max_tile and units // d >= min_blocks:
            best = d * 128
    return best


# ---------------------------------------------------------------------------
# Kernels
# ---------------------------------------------------------------------------
def _noisy_linear_train_kernel(x_ref, ei_ref, wmu_ref, wsg_ref, side_ref,
                               o_ref, acc_mu_ref, acc_sg_ref,
                               *, t_in, n_k, x_resident, dot_dtype):
    """Grid = (b_tiles, out_tiles, in_tiles); in_tiles (axis 2) is the
    reduction. Weights are (t_out, t_in) blocks of the untransposed matrix."""
    k = pl.program_id(2)

    @pl.when(k == 0)
    def _():
        acc_mu_ref[...] = jnp.zeros_like(acc_mu_ref)
        acc_sg_ref[...] = jnp.zeros_like(acc_sg_ref)

    # x block: either the streamed (t_b, t_in) tile or a slice of the
    # resident (t_b, in_pad) block.
    if x_resident and n_k > 1:
        start = pl.multiple_of(k * t_in, t_in)
        x = x_ref[:, pl.ds(start, t_in)]
    else:
        x = x_ref[...]
    # eps_i row is always resident (1, in_pad); slice if reducing over k.
    if n_k > 1:
        start_e = pl.multiple_of(k * t_in, t_in)
        ei = ei_ref[:, pl.ds(start_e, t_in)]
    else:
        ei = ei_ref[...]

    x_f32 = x.astype(jnp.float32)
    xn = (x_f32 * ei).astype(dot_dtype)          # f32 multiply, single cast
    xd = x.astype(dot_dtype)

    dn = (((1,), (1,)), ((), ()))                # contract x dim1 with W dim1
    acc_mu_ref[...] += lax.dot_general(xd, wmu_ref[...], dn,
                                       preferred_element_type=jnp.float32)
    acc_sg_ref[...] += lax.dot_general(xn, wsg_ref[...], dn,
                                       preferred_element_type=jnp.float32)

    @pl.when(k == n_k - 1)
    def _():
        bias = side_ref[0:1, :]                  # mu_b + sigma_b * eps_j (f32)
        ej = side_ref[1:2, :]                    # eps_j (f32)
        o_ref[...] = (acc_mu_ref[...] + acc_sg_ref[...] * ej
                      + bias).astype(o_ref.dtype)


def _linear_eval_kernel(x_ref, wmu_ref, b_ref, o_ref, acc_ref,
                        *, t_in, n_k, x_resident, dot_dtype):
    """Eval mode: plain linear, the sigma path is never touched."""
    k = pl.program_id(2)

    @pl.when(k == 0)
    def _():
        acc_ref[...] = jnp.zeros_like(acc_ref)

    if x_resident and n_k > 1:
        start = pl.multiple_of(k * t_in, t_in)
        x = x_ref[:, pl.ds(start, t_in)]
    else:
        x = x_ref[...]

    dn = (((1,), (1,)), ((), ()))
    acc_ref[...] += lax.dot_general(x.astype(dot_dtype), wmu_ref[...], dn,
                                    preferred_element_type=jnp.float32)

    @pl.when(k == n_k - 1)
    def _():
        o_ref[...] = (acc_ref[...] + b_ref[...]).astype(o_ref.dtype)


# ---------------------------------------------------------------------------
# One-time parameter preparation (pad / cast once, keep native layout)
# ---------------------------------------------------------------------------
def prepare_noisy_linear_params(mu_w, sigma_w, mu_b, sigma_b, *,
                                weight_dtype=None, tile_in=1024, tile_out=512):
    """Pads the (num_out, num_in) weights to multiples of 128 and casts them
    ONCE. Call this when the layer is created, not per forward.
    NOTE: on v5e (lowest HBM BW) prefer weight_dtype=jnp.bfloat16."""
    num_out, num_in = mu_w.shape
    w_dtype = (jnp.dtype(weight_dtype) if weight_dtype is not None
               else jnp.dtype(mu_w.dtype))

    in_pad = _round_up(num_in, 128)
    out_pad = _round_up(num_out, 128)
    t_in = _pick_tile(in_pad, max(int(tile_in), 128))
    # >= 2 out-tile blocks when possible so v7x's second TC has work.
    t_out = _pick_tile(out_pad, max(int(tile_out), 128),
                       min_blocks=2 if out_pad >= 256 else 1)

    def pad_w(w):
        w = w.astype(w_dtype)
        if (num_out, num_in) == (out_pad, in_pad):
            return w
        return jnp.zeros((out_pad, in_pad), w_dtype).at[:num_out, :num_in].set(w)

    return dict(
        w_mu=pad_w(mu_w), w_sigma=pad_w(sigma_w),
        mu_b=mu_b.astype(jnp.float32), sigma_b=sigma_b.astype(jnp.float32),
        num_in=num_in, num_out=num_out, in_pad=in_pad, out_pad=out_pad,
        t_in=t_in, t_out=t_out, w_dtype=w_dtype)


# ---------------------------------------------------------------------------
# Forward
# ---------------------------------------------------------------------------
def factorized_noisy_linear(x, params, eps_i, eps_j, *, is_training=True,
                            tile_b=256):
    """x: (B, num_in). `params` from prepare_noisy_linear_params.
    eps_i / eps_j are the already-f()-transformed factorized noise vectors."""
    num_in, num_out = params["num_in"], params["num_out"]
    in_pad, out_pad = params["in_pad"], params["out_pad"]
    t_in, t_out = params["t_in"], params["t_out"]
    w_dtype = params["w_dtype"]

    B = x.shape[0]
    out_dtype = x.dtype
    x_itemsize = jnp.dtype(x.dtype).itemsize

    # Batch padding follows the dtype's sublane packing (f32:8, bf16:16, 8-bit:32).
    min_sub = max(8, 32 // x_itemsize)
    tile_b = _round_up(max(int(tile_b), min_sub), min_sub)
    t_b = min(tile_b, _round_up(B, min_sub))
    B_pad = _round_up(B, t_b)

    grid_b = B_pad // t_b
    grid_j = out_pad // t_out
    grid_k = in_pad // t_in

    # Pad x only if needed (per-call, but O(B * num_in) and unavoidable).
    if (B_pad, in_pad) == tuple(x.shape):
        xp = x
    else:
        xp = jnp.zeros((B_pad, in_pad), x.dtype).at[:B, :num_in].set(x)

    # Keep x resident across the (out, in) loops when a batch-tile of it fits.
    x_resident = (t_b * in_pad * x_itemsize) <= (4 << 20)
    x_block_in = in_pad if x_resident else t_in
    if x_resident:
        x_spec = pl.BlockSpec((t_b, in_pad), lambda b, j, k: (b, 0))
    else:
        x_spec = pl.BlockSpec((t_b, t_in), lambda b, j, k: (b, k))

    w_spec = pl.BlockSpec((t_out, t_in), lambda b, j, k: (j, k))
    out_spec = pl.BlockSpec((t_b, t_out), lambda b, j, k: (b, j))

    # --- VMEM budget from actual tile shapes (inputs double-buffered) ------
    w_itemsize = jnp.dtype(w_dtype).itemsize
    o_itemsize = jnp.dtype(out_dtype).itemsize
    n_w = 2 if is_training else 1
    n_acc = 2 if is_training else 1
    need = (2 * t_b * x_block_in * x_itemsize            # x buffers
            + 2 * n_w * t_out * t_in * w_itemsize        # weight buffers
            + 2 * in_pad * 4 + 2 * 2 * t_out * 4         # eps_i / bias rows
            + 2 * t_b * t_out * o_itemsize               # output buffers
            + n_acc * t_b * t_out * 4)                   # f32 accumulators
    need += 1 << 20                                      # compiler slack
    try:
        cap = int(0.45 * pltpu.get_tpu_info().vmem_capacity_bytes)
    except Exception:  # fall back to a v7x-safe cap
        cap = 28 << 20
    vmem_bytes = int(min(max(need, 4 << 20), max(cap, need)))

    compiler_params = pltpu.CompilerParams(
        dimension_semantics=("parallel", "parallel", "arbitrary"),
        vmem_limit_bytes=vmem_bytes)

    if is_training:
        # Tiny O(num_in + num_out) per-call host work (noise changes per call).
        ei = jnp.zeros((1, in_pad), jnp.float32).at[0, :num_in].set(
            eps_i.astype(jnp.float32))
        b_noisy = params["mu_b"] + params["sigma_b"] * eps_j.astype(jnp.float32)
        side = jnp.zeros((2, out_pad), jnp.float32)
        side = side.at[0, :num_out].set(b_noisy)
        side = side.at[1, :num_out].set(eps_j.astype(jnp.float32))

        kernel = functools.partial(
            _noisy_linear_train_kernel, t_in=t_in, n_k=grid_k,
            x_resident=x_resident, dot_dtype=w_dtype)
        grid_spec = pltpu.PrefetchScalarGridSpec(
            num_scalar_prefetch=0,
            grid=(grid_b, grid_j, grid_k),
            in_specs=[
                x_spec,                                              # x
                pl.BlockSpec((1, in_pad), lambda b, j, k: (0, 0)),   # eps_i row
                w_spec,                                              # mu_W
                w_spec,                                              # sigma_W
                pl.BlockSpec((2, t_out), lambda b, j, k: (0, j)),    # [bias; eps_j]
            ],
            out_specs=out_spec,
            scratch_shapes=[pltpu.VMEM((t_b, t_out), jnp.float32),
                            pltpu.VMEM((t_b, t_out), jnp.float32)])
        y_pad = pl.pallas_call(
            kernel,
            out_shape=jax.ShapeDtypeStruct((B_pad, out_pad), out_dtype),
            grid_spec=grid_spec,
            compiler_params=compiler_params,
        )(xp, ei, params["w_mu"], params["w_sigma"], side)
    else:
        bias = jnp.zeros((1, out_pad), jnp.float32).at[0, :num_out].set(
            params["mu_b"])
        kernel = functools.partial(
            _linear_eval_kernel, t_in=t_in, n_k=grid_k,
            x_resident=x_resident, dot_dtype=w_dtype)
        grid_spec = pltpu.PrefetchScalarGridSpec(
            num_scalar_prefetch=0,
            grid=(grid_b, grid_j, grid_k),
            in_specs=[
                x_spec,
                w_spec,
                pl.BlockSpec((1, t_out), lambda b, j, k: (0, j)),    # mu_b
            ],
            out_specs=out_spec,
            scratch_shapes=[pltpu.VMEM((t_b, t_out), jnp.float32)])
        y_pad = pl.pallas_call(
            kernel,
            out_shape=jax.ShapeDtypeStruct((B_pad, out_pad), out_dtype),
            grid_spec=grid_spec,
            compiler_params=compiler_params,
        )(xp, params["w_mu"], bias)

    return y_pad[:B, :num_out]


# ---------------------------------------------------------------------------
# Host-side glue (mirrors reset_parameters / reset_noise)
# ---------------------------------------------------------------------------
def _f_noise(e):
    # PyTorch: eps.sign() * eps.abs().sqrt()
    return jnp.sign(e) * jnp.sqrt(jnp.abs(e))


def init_params(key, num_in, num_out):
    std = 1.0 / math.sqrt(num_in)
    k1, k2 = jax.random.split(key)
    mu_w = jax.random.uniform(k1, (num_out, num_in), jnp.float32, -std, std)
    mu_b = jax.random.uniform(k2, (num_out,), jnp.float32, -std, std)
    sigma_w = jnp.full((num_out, num_in), 0.5 / math.sqrt(num_in), jnp.float32)
    sigma_b = jnp.full((num_out,), 0.5 / math.sqrt(num_in), jnp.float32)
    return mu_w, sigma_w, mu_b, sigma_b


if __name__ == "__main__":
    num_in, num_out, batch = 32, 64, 2

    key = jax.random.PRNGKey(0)
    kp, kx, ki, kj = jax.random.split(key, 4)

    mu_w, sigma_w, mu_b, sigma_b = init_params(kp, num_in, num_out)
    x = jax.random.normal(kx, (batch, num_in), jnp.float32)

    # reset_noise(): factorized Gaussian noise with f(x) = sign(x)*sqrt(|x|)
    eps_i = _f_noise(jax.random.normal(ki, (num_in,), jnp.float32))
    eps_j = _f_noise(jax.random.normal(kj, (num_out,), jnp.float32))

    # Pure-JAX reference (explicit noisy weight matrix, PyTorch semantics).
    w_ref = mu_w + sigma_w * (eps_j[:, None] * eps_i[None, :])
    b_ref = mu_b + sigma_b * eps_j
    y_ref = x @ w_ref.T + b_ref

    # Parameters are padded / cast ONCE (not per forward call).
    params_f32 = prepare_noisy_linear_params(mu_w, sigma_w, mu_b, sigma_b)

    # 1) training mode, f32 weights -> tight check
    y = jax.block_until_ready(
        factorized_noisy_linear(x, params_f32, eps_i, eps_j, is_training=True))
    assert y.shape == (batch, num_out)
    assert jnp.allclose(y, y_ref, atol=1e-4, rtol=1e-4), "train mismatch"

    # 2) eval mode (sigma path skipped entirely in the kernel)
    y_eval = jax.block_until_ready(
        factorized_noisy_linear(x, params_f32, eps_i, eps_j, is_training=False))
    y_eval_ref = x @ mu_w.T + mu_b
    assert jnp.allclose(y_eval, y_eval_ref, atol=1e-4, rtol=1e-4), "eval mismatch"

    # 3) bf16-weight fast path (halves weight HBM traffic), looser tolerance
    params_bf16 = prepare_noisy_linear_params(mu_w, sigma_w, mu_b, sigma_b,
                                              weight_dtype=jnp.bfloat16)
    y_bf16 = jax.block_until_ready(
        factorized_noisy_linear(x, params_bf16, eps_i, eps_j, is_training=True))
    assert jnp.allclose(y_bf16, y_ref, atol=5e-2, rtol=5e-2), "bf16 mismatch"

    print("KERNEL_OK")
</pallas_src>

<mosaic_0001>
module attributes {stable_mosaic.version = 11 : i64} {
  func.func @_noisy_linear_train_kernel(%arg0: i32, %arg1: i32, %arg2: i32, %arg3: memref<8x128xf32, #tpu.memory_space<vmem>>, %arg4: memref<1x128xf32, #tpu.memory_space<vmem>>, %arg5: memref<128x128xf32, #tpu.memory_space<vmem>>, %arg6: memref<128x128xf32, #tpu.memory_space<vmem>>, %arg7: memref<2x128xf32, #tpu.memory_space<vmem>>, %arg8: memref<8x128xf32, #tpu.memory_space<vmem>>, %arg9: memref<8x128xf32, #tpu.memory_space<vmem>>, %arg10: memref<8x128xf32, #tpu.memory_space<vmem>>) attributes {dimension_semantics = [#tpu.dimension_semantics<parallel>, #tpu.dimension_semantics<parallel>, #tpu.dimension_semantics<arbitrary>], iteration_bounds = array<i64: 1, 1, 1>, scalar_prefetch = 0 : i64, scratch_operands = 2 : i64, tpu.core_type = #tpu.core_type<tc>, window_params = [{transform_indices = @transform_0, window_bounds = array<i64: 8, 128>}, {pipeline_mode = #tpu.pipeline_mode<synchronous>, transform_indices = @transform_1, window_bounds = array<i64: 1, 128>}, {transform_indices = @transform_2, window_bounds = array<i64: 128, 128>}, {transform_indices = @transform_3, window_bounds = array<i64: 128, 128>}, {transform_indices = @transform_4, window_bounds = array<i64: 2, 128>}, {transform_indices = @transform_5, window_bounds = array<i64: 8, 128>}]} {
    %c0_i32 = arith.constant 0 : i32
    %0 = arith.cmpi eq, %arg2, %c0_i32 : i32
    %1 = arith.extui %0 : i1 to i32
    %c0_i32_0 = arith.constant 0 : i32
    %2 = arith.cmpi ne, %1, %c0_i32_0 : i32
    scf.if %2 {
      %cst_19 = arith.constant 0.000000e+00 : f32
      %20 = vector.broadcast %cst_19 : f32 to vector<8x128xf32>
      %c0_20 = arith.constant 0 : index
      %c0_21 = arith.constant 0 : index
      %21 = vector.load %arg9[%c0_20, %c0_21] : memref<8x128xf32, #tpu.memory_space<vmem>>, vector<8x128xf32>
      tpu.vector_store %arg9[%c0_20, %c0_21], %20 {strides = array<i32>} : memref<8x128xf32, #tpu.memory_space<vmem>>, vector<8x128xf32>,
      %cst_22 = arith.constant 0.000000e+00 : f32
      %22 = vector.broadcast %cst_22 : f32 to vector<8x128xf32>
      %c0_23 = arith.constant 0 : index
      %c0_24 = arith.constant 0 : index
      %23 = vector.load %arg10[%c0_23, %c0_24] : memref<8x128xf32, #tpu.memory_space<vmem>>, vector<8x128xf32>
      tpu.vector_store %arg10[%c0_23, %c0_24], %22 {strides = array<i32>} : memref<8x128xf32, #tpu.memory_space<vmem>>, vector<8x128xf32>,
    } else {
    }
    %c0 = arith.constant 0 : index
    %c0_1 = arith.constant 0 : index
    %3 = vector.load %arg3[%c0, %c0_1] : memref<8x128xf32, #tpu.memory_space<vmem>>, vector<8x128xf32>
    %c0_2 = arith.constant 0 : index
    %c0_3 = arith.constant 0 : index
    %4 = vector.load %arg4[%c0_2, %c0_3] : memref<1x128xf32, #tpu.memory_space<vmem>>, vector<1x128xf32>
    %5 = vector.broadcast %4 : vector<1x128xf32> to vector<8x128xf32>
    %6 = arith.mulf %3, %5 : vector<8x128xf32>
    %c0_4 = arith.constant 0 : index
    %c0_5 = arith.constant 0 : index
    %7 = vector.load %arg9[%c0_4, %c0_5] : memref<8x128xf32, #tpu.memory_space<vmem>>, vector<8x128xf32>
    %c0_6 = arith.constant 0 : index
    %c0_7 = arith.constant 0 : index
    %8 = vector.load %arg5[%c0_6, %c0_7] : memref<128x128xf32, #tpu.memory_space<vmem>>, vector<128x128xf32>
    %cst = arith.constant dense<0.000000e+00> : vector<8x128xf32>
    %9 = tpu.matmul %3, %8, %cst {dimension_numbers = #tpu.dot_dimension_numbers<[1], [1], [0], [0], [0, 0, 1, 0], [], []>} : vector<8x128xf32>, vector<128x128xf32>, vector<8x128xf32> -> vector<8x128xf32>
    %10 = arith.addf %7, %9 : vector<8x128xf32>
    %c0_8 = arith.constant 0 : index
    %c0_9 = arith.constant 0 : index
    %11 = vector.load %arg9[%c0_8, %c0_9] : memref<8x128xf32, #tpu.memory_space<vmem>>, vector<8x128xf32>
    tpu.vector_store %arg9[%c0_8, %c0_9], %10 {strides = array<i32>} : memref<8x128xf32, #tpu.memory_space<vmem>>, vector<8x128xf32>,
    %c0_10 = arith.constant 0 : index
    %c0_11 = arith.constant 0 : index
    %12 = vector.load %arg10[%c0_10, %c0_11] : memref<8x128xf32, #tpu.memory_space<vmem>>, vector<8x128xf32>
    %c0_12 = arith.constant 0 : index
    %c0_13 = arith.constant 0 : index
    %13 = vector.load %arg6[%c0_12, %c0_13] : memref<128x128xf32, #tpu.memory_space<vmem>>, vector<128x128xf32>
    %cst_14 = arith.constant dense<0.000000e+00> : vector<8x128xf32>
    %14 = tpu.matmul %6, %13, %cst_14 {dimension_numbers = #tpu.dot_dimension_numbers<[1], [1], [0], [0], [0, 0, 1, 0], [], []>} : vector<8x128xf32>, vector<128x128xf32>, vector<8x128xf32> -> vector<8x128xf32>
    %15 = arith.addf %12, %14 : vector<8x128xf32>
    %c0_15 = arith.constant 0 : index
    %c0_16 = arith.constant 0 : index
    %16 = vector.load %arg10[%c0_15, %c0_16] : memref<8x128xf32, #tpu.memory_space<vmem>>, vector<8x128xf32>
    tpu.vector_store %arg10[%c0_15, %c0_16], %15 {strides = array<i32>} : memref<8x128xf32, #tpu.memory_space<vmem>>, vector<8x128xf32>,
    %c0_i32_17 = arith.constant 0 : i32
    %17 = arith.cmpi eq, %arg2, %c0_i32_17 : i32
    %18 = arith.extui %17 : i1 to i32
    %c0_i32_18 = arith.constant 0 : i32
    %19 = arith.cmpi ne, %18, %c0_i32_18 : i32
    scf.if %19 {
      %c0_19 = arith.constant 0 : index
      %c0_20 = arith.constant 0 : index
      %20 = vector.load %arg7[%c0_19, %c0_20] : memref<2x128xf32, #tpu.memory_space<vmem>>, vector<1x128xf32>
      %c1 = arith.constant 1 : index
      %c0_21 = arith.constant 0 : index
      %21 = vector.load %arg7[%c1, %c0_21] : memref<2x128xf32, #tpu.memory_space<vmem>>, vector<1x128xf32>
      %c0_22 = arith.constant 0 : index
      %c0_23 = arith.constant 0 : index
      %22 = vector.load %arg9[%c0_22, %c0_23] : memref<8x128xf32, #tpu.memory_space<vmem>>, vector<8x128xf32>
      %c0_24 = arith.constant 0 : index
      %c0_25 = arith.constant 0 : index
      %23 = vector.load %arg10[%c0_24, %c0_25] : memref<8x128xf32, #tpu.memory_space<vmem>>, vector<8x128xf32>
      %24 = vector.broadcast %21 : vector<1x128xf32> to vector<8x128xf32>
      %25 = arith.mulf %23, %24 : vector<8x128xf32>
      %26 = arith.addf %22, %25 : vector<8x128xf32>
      %27 = vector.broadcast %20 : vector<1x128xf32> to vector<8x128xf32>
      %28 = arith.addf %26, %27 : vector<8x128xf32>
      %c0_26 = arith.constant 0 : index
      %c0_27 = arith.constant 0 : index
      %29 = vector.load %arg8[%c0_26, %c0_27] : memref<8x128xf32, #tpu.memory_space<vmem>>, vector<8x128xf32>
      tpu.vector_store %arg8[%c0_26, %c0_27], %28 {strides = array<i32>} : memref<8x128xf32, #tpu.memory_space<vmem>>, vector<8x128xf32>,
    } else {
    }
    return
  }
  func.func @transform_0(%arg0: i32, %arg1: i32, %arg2: i32) -> (i32, i32) {
    %c0_i32 = arith.constant 0 : i32
    %c0_i32_0 = arith.constant 0 : i32
    return %arg0, %c0_i32 : i32, i32
  }
  func.func @transform_1(%arg0: i32, %arg1: i32, %arg2: i32) -> (i32, i32) {
    %c0_i32 = arith.constant 0 : i32
    %c0_i32_0 = arith.constant 0 : i32
    %c0_i32_1 = arith.constant 0 : i32
    return %c0_i32, %c0_i32_0 : i32, i32
  }
  func.func @transform_2(%arg0: i32, %arg1: i32, %arg2: i32) -> (i32, i32) {
    %c0_i32 = arith.constant 0 : i32
    return %arg1, %arg2 : i32, i32
  }
  func.func @transform_3(%arg0: i32, %arg1: i32, %arg2: i32) -> (i32, i32) {
    %c0_i32 = arith.constant 0 : i32
    return %arg1, %arg2 : i32, i32
  }
  func.func @transform_4(%arg0: i32, %arg1: i32, %arg2: i32) -> (i32, i32) {
    %c0_i32 = arith.constant 0 : i32
    %c0_i32_0 = arith.constant 0 : i32
    return %c0_i32, %arg1 : i32, i32
  }
  func.func @transform_5(%arg0: i32, %arg1: i32, %arg2: i32) -> (i32, i32) {
    %c0_i32 = arith.constant 0 : i32
    return %arg0, %arg1 : i32, i32
  }
}

</mosaic_0001>

<llo_original>
// kernel: tpu_custom_call.1
$region0: #{tpu_custom_call.1}
  #allocation0 [shape = 'u32[]', space=smem, size = 0x4, offset = 0x4, fixed_abs, tag = 'smem constant byte address 0x4 - core index']
  #allocation1 [shape = 'u32[144,128]{1,0:T(1,128)}', space=vmem, size = 0x12000, scoped, tag = 'internal scratch']
  #allocation2 [shape = 'f32[8,128]{1,0:T(8,128)}', space=vmem, size = 0x1000, scoped, tag = 'scratch operand']
  #allocation3 [shape = 'f32[8,128]{1,0:T(8,128)}', space=vmem, size = 0x1000, scoped, tag = 'scratch operand']
  %s0 = inlined_call_operand.hbm [shape: f32[8,128], index: 0, kind: input, shape index: {}]
  %s1 = inlined_call_operand.vmem [shape: f32[1,128], index: 1, kind: input, shape index: {}]
  %s2 = inlined_call_operand.hbm [shape: f32[128,128], index: 2, kind: input, shape index: {}]
  %s3 = inlined_call_operand.hbm [shape: f32[128,128], index: 3, kind: input, shape index: {}]
  %s4 = inlined_call_operand.vmem [shape: f32[2,128], index: 4, kind: input, shape index: {}]
  %s5 = inlined_call_operand.hbm [shape: f32[8,128], index: 5, kind: output, shape index: {}]
  %s6 = sld [smem:[#allocation0]]
  $region50: #{tpu_custom_call.1} parent=0
    _
  %s8 = ssub.s32 1, %s6
  %s9 = scalar_select 0, %s8, %s6
  $region1: #{tpu_custom_call.1} parent=0
    #allocation4 [shape = 'u8[4096]{0}', space=vmem, size = 0x1000, scoped, tag = 'input window, operand 0, single buffered']
    #allocation5 [shape = 's32[1]{0}', space=sflag, size = 0x4, scoped, tag = 'scoped memory for tpu_custom_call.1']
    #allocation6 [shape = 's32[1]{0}', space=sflag, size = 0x4, scoped, tag = 'scoped memory for tpu_custom_call.1']
    #allocation7 [shape = 'u8[65536]{0}', space=vmem, size = 0x10000, scoped, tag = 'input window, operand 2, single buffered']
    #allocation8 [shape = 's32[1]{0}', space=sflag, size = 0x4, scoped, tag = 'scoped memory for tpu_custom_call.1']
    #allocation9 [shape = 'u8[65536]{0}', space=vmem, size = 0x10000, scoped, tag = 'input window, operand 3, single buffered']
    #allocation10 [shape = 'u8[4096]{0}', space=vmem, size = 0x1000, scoped, tag = 'output window, operand 0, single buffered']
    %10 = vsyncpa [#allocation5], 0
    %11 = vsyncpa [#allocation8], 0
    %12 = vsyncpa [#allocation6], 0
    // Predicated region
    $region2: #{tpu_custom_call.1} parent=1 // pred_check
      _
    $region3: #{tpu_custom_call.1} parent=1 // pred_check_branch
      %14 = sbr.rel (0) target = $region5
    $region4: #{tpu_custom_call.1} parent=1 // pred_region
      %s16 = ssub.s32 128, 128
      %17 = vsyncadd [#allocation5], %s16
      %s19 = sshll.u32 [#allocation4], 4
      %s20 = int_to_ptr.vmem [resolvable:$true] %s19
      %22 = dma.hbm_to_vmem [thread:$0]  %s0, 128, %s20, [#allocation5]
    $region5: #{tpu_custom_call.1} parent=1 // pred_fallthru
      _
    // Predicated region
    $region6: #{tpu_custom_call.1} parent=1 // pred_check
      _
    $region7: #{tpu_custom_call.1} parent=1 // pred_check_branch
      %24 = sbr.rel (0) target = $region9
    $region8: #{tpu_custom_call.1} parent=1 // pred_region
      _
    $region9: #{tpu_custom_call.1} parent=1 // pred_fallthru
      _
    // Predicated region
    $region10: #{tpu_custom_call.1} parent=1 // pred_check
      _
    $region11: #{tpu_custom_call.1} parent=1 // pred_check_branch
      %26 = sbr.rel (0) target = $region13
    $region12: #{tpu_custom_call.1} parent=1 // pred_region
      %s28 = ssub.s32 2048, 2048
      %29 = vsyncadd [#allocation8], %s28
      %s30 = sshll.u32 [#allocation7], 4
      %s31 = int_to_ptr.vmem [resolvable:$true] %s30
      %36 = dma.hbm_to_vmem [thread:$0]  %s2, 2048, %s31, [#allocation8], 128, 128, 8
    $region13: #{tpu_custom_call.1} parent=1 // pred_fallthru
      _
    // Predicated region
    $region14: #{tpu_custom_call.1} parent=1 // pred_check
      _
    $region15: #{tpu_custom_call.1} parent=1 // pred_check_branch
      %38 = sbr.rel (0) target = $region17
    $region16: #{tpu_custom_call.1} parent=1 // pred_region
      %s40 = ssub.s32 2048, 2048
      %41 = vsyncadd [#allocation8], %s40
      %s42 = sshll.u32 [#allocation9], 4
      %s43 = int_to_ptr.vmem [resolvable:$true] %s42
      %48 = dma.hbm_to_vmem [thread:$0]  %s3, 2048, %s43, [#allocation8], 128, 128, 8
    $region17: #{tpu_custom_call.1} parent=1 // pred_fallthru
      _
    // Predicated region
    $region18: #{tpu_custom_call.1} parent=1 // pred_check
      _
    $region19: #{tpu_custom_call.1} parent=1 // pred_check_branch
      %50 = sbr.rel (0) target = $region21
    $region20: #{tpu_custom_call.1} parent=1 // pred_region
      _
    $region21: #{tpu_custom_call.1} parent=1 // pred_fallthru
      _
    // Predicated region
    $region22: #{tpu_custom_call.1} parent=1 // pred_check
      _
    $region23: #{tpu_custom_call.1} parent=1 // pred_check_branch
      %52 = sbr.rel (0) target = $region25
    $region24: #{tpu_custom_call.1} parent=1 // pred_region
      %53 = dma.done [#allocation5], 128
    $region25: #{tpu_custom_call.1} parent=1 // pred_fallthru
      _
    // Predicated region
    $region26: #{tpu_custom_call.1} parent=1 // pred_check
      _
    $region27: #{tpu_custom_call.1} parent=1 // pred_check_branch
      %55 = sbr.rel (0) target = $region29
    $region28: #{tpu_custom_call.1} parent=1 // pred_region
      %56 = dma.done [#allocation8], 2048
    $region29: #{tpu_custom_call.1} parent=1 // pred_fallthru
      _
    // Predicated region
    $region30: #{tpu_custom_call.1} parent=1 // pred_check
      _
    $region31: #{tpu_custom_call.1} parent=1 // pred_check_branch
      %58 = sbr.rel (0) target = $region33
    $region32: #{tpu_custom_call.1} parent=1 // pred_region
      %59 = dma.done [#allocation8], 2048
    $region33: #{tpu_custom_call.1} parent=1 // pred_fallthru
      _
    %p60 = scmp.eq.s32.totalorder 0, 0
    // Predicated region
    $region34: #{tpu_custom_call.1} parent=1 // pred_check
      %p61 = pneg %p60
    $region35: #{tpu_custom_call.1} parent=1 // pred_check_branch
      %63 = sbr.rel (%p61) target = $region37
    $region36: #{tpu_custom_call.1} parent=1 // pred_region
      %64 = vst [vmem:[#allocation2] sm:$0xff] 0.0
      %65 = vst [vmem:[#allocation3] sm:$0xff] 0.0
    $region37: #{tpu_custom_call.1} parent=1 // pred_fallthru
      _
    %v66 = vld [vmem:[#allocation4] sm:$0xff]
    %v67 = vld [vmem:[%s1] sm:$0x1]
    %v69 = vlaneseq
    %v70 = vshrl.u32 %v69, 7
    %v71 = vsub.s32 0, %v70
    %v72 = vrot.slane %v67, %v71
    %v74 = vmul.f32 %v66, %v72
    %v75 = vld [vmem:[#allocation2] sm:$0xff]
    %v76 = vld [vmem:[#allocation7] sm:$0xff]
    %v77 = vld [vmem:[#allocation7 + $0x8] sm:$0xff]
    %v78 = vld [vmem:[#allocation7 + $0x10] sm:$0xff]
    %v79 = vld [vmem:[#allocation7 + $0x18] sm:$0xff]
    %v80 = vld [vmem:[#allocation7 + $0x20] sm:$0xff]
    %v81 = vld [vmem:[#allocation7 + $0x28] sm:$0xff]
    %v82 = vld [vmem:[#allocation7 + $0x30] sm:$0xff]
    %v83 = vld [vmem:[#allocation7 + $0x38] sm:$0xff]
    %v84 = vld [vmem:[#allocation7 + $0x40] sm:$0xff]
    %v85 = vld [vmem:[#allocation7 + $0x48] sm:$0xff]
    %v86 = vld [vmem:[#allocation7 + $0x50] sm:$0xff]
    %v87 = vld [vmem:[#allocation7 + $0x58] sm:$0xff]
    %v88 = vld [vmem:[#allocation7 + $0x60] sm:$0xff]
    %v89 = vld [vmem:[#allocation7 + $0x68] sm:$0xff]
    %v90 = vld [vmem:[#allocation7 + $0x70] sm:$0xff]
    %v91 = vld [vmem:[#allocation7 + $0x78] sm:$0xff]
    %92 = vmatprep.subr.mxu0 0.0
    %93 = vmatpush1.xpose.msra.mxu0 %v76
    %94 = vmatprep.subr.mxu0 0.0
    %95 = vmatpush1.xpose.msra.mxu0 %v77
    %96 = vmatprep.subr.mxu0 0.0
    %97 = vmatpush1.xpose.msra.mxu0 %v78
    %98 = vmatprep.subr.mxu0 0.0
    %99 = vmatpush1.xpose.msra.mxu0 %v79
    %100 = vmatprep.subr.mxu0 0.0
    %101 = vmatpush1.xpose.msra.mxu0 %v80
    %102 = vmatprep.subr.mxu0 0.0
    %103 = vmatpush1.xpose.msra.mxu0 %v81
    %104 = vmatprep.subr.mxu0 0.0
    %105 = vmatpush1.xpose.msra.mxu0 %v82
    %106 = vmatprep.subr.mxu0 0.0
    %107 = vmatpush1.xpose.msra.mxu0 %v83
    %108 = vmatprep.subr.mxu0 0.0
    %109 = vmatpush1.xpose.msra.mxu0 %v84
    %110 = vmatprep.subr.mxu0 0.0
    %111 = vmatpush1.xpose.msra.mxu0 %v85
    %112 = vmatprep.subr.mxu0 0.0
    %113 = vmatpush1.xpose.msra.mxu0 %v86
    %114 = vmatprep.subr.mxu0 0.0
    %115 = vmatpush1.xpose.msra.mxu0 %v87
    %116 = vmatprep.subr.mxu0 0.0
    %117 = vmatpush1.xpose.msra.mxu0 %v88
    %118 = vmatprep.subr.mxu0 0.0
    %119 = vmatpush1.xpose.msra.mxu0 %v89
    %120 = vmatprep.subr.mxu0 0.0
    %121 = vmatpush1.xpose.msra.mxu0 %v90
    %122 = vmatprep.subr.mxu0 0.0
    %123 = vmatpush1.xpose.msra.mxu0 %v91
    %124 = vmatprep.subr.mxu0 0.0
    %125 = vmatpush1.xpose.msra.mxu0 0.0
    %126 = vmatprep.subr.mxu0 0.0
    %127 = vmatpush1.xpose.msra.mxu0 0.0
    %128 = vmatprep.subr.mxu0 0.0
    %129 = vmatpush1.xpose.msra.mxu0 0.0
    %130 = vmatprep.subr.mxu0 0.0
    %131 = vmatpush1.xpose.msra.mxu0 0.0
    %132 = vmatprep.subr.mxu0 0.0
    %133 = vmatpush1.xpose.msra.mxu0 0.0
    %134 = vmatprep.subr.mxu0 0.0
    %135 = vmatpush1.xpose.msra.mxu0 0.0
    %136 = vmatprep.subr.mxu0 0.0
    %137 = vmatpush1.xpose.msra.mxu0 0.0
    %138 = vmatprep.subr.mxu0 0.0
    %139 = vmatpush1.xpose.msra.mxu0 0.0
    %140 = vmatprep.subr.mxu0 0.0
    %141 = vmatpush1.xpose.msra.mxu0 0.0
    %142 = vmatprep.subr.mxu0 0.0
    %143 = vmatpush1.xpose.msra.mxu0 0.0
    %144 = vmatprep.subr.mxu0 0.0
    %145 = vmatpush1.xpose.msra.mxu0 0.0
    %146 = vmatprep.subr.mxu0 0.0
    %147 = vmatpush1.xpose.msra.mxu0 0.0
    %148 = vmatprep.subr.mxu0 0.0
    %149 = vmatpush1.xpose.msra.mxu0 0.0
    %150 = vmatprep.subr.mxu0 0.0
    %151 = vmatpush1.xpose.msra.mxu0 0.0
    %152 = vmatprep.subr.mxu0 0.0
    %153 = vmatpush1.xpose.msra.mxu0 0.0
    %154 = vmatprep.subr.mxu0 0.0
    %155 = vmatpush1.xpose.msra.mxu0 0.0
    %156 = vmatprep.mubr.f32.mxu0 0.0
    %157 = vmatmul.mubr.f32.gmra.mrb[0].mxu0 %v66
    %v158 = vpop.f32.mrb[0].mxu0
    %v159 = vadd.f32 0.0, %v158
    %v160 = vpop.f32.mrb[0].mxu0
    %161 = vdwg.mxu0
    %v162 = vadd.f32 %v75, %v159
    %163 = vst [vmem:[#allocation2] sm:$0xff] %v162
    %v164 = vld [vmem:[#allocation3] sm:$0xff]
    %v165 = vld [vmem:[#allocation9] sm:$0xff]
    %v166 = vld [vmem:[#allocation9 + $0x8] sm:$0xff]
    %v167 = vld [vmem:[#allocation9 + $0x10] sm:$0xff]
    %v168 = vld [vmem:[#allocation9 + $0x18] sm:$0xff]
    %v169 = vld [vmem:[#allocation9 + $0x20] sm:$0xff]
    %v170 = vld [vmem:[#allocation9 + $0x28] sm:$0xff]
    %v171 = vld [vmem:[#allocation9 + $0x30] sm:$0xff]
    %v172 = vld [vmem:[#allocation9 + $0x38] sm:$0xff]
    %v173 = vld [vmem:[#allocation9 + $0x40] sm:$0xff]
    %v174 = vld [vmem:[#allocation9 + $0x48] sm:$0xff]
    %v175 = vld [vmem:[#allocation9 + $0x50] sm:$0xff]
    %v176 = vld [vmem:[#allocation9 + $0x58] sm:$0xff]
    %v177 = vld [vmem:[#allocation9 + $0x60] sm:$0xff]
    %v178 = vld [vmem:[#allocation9 + $0x68] sm:$0xff]
    %v179 = vld [vmem:[#allocation9 + $0x70] sm:$0xff]
    %v180 = vld [vmem:[#allocation9 + $0x78] sm:$0xff]
    %181 = vmatprep.subr.mxu0 0.0
    %182 = vmatpush1.xpose.msra.mxu0 %v165
    %183 = vmatprep.subr.mxu0 0.0
    %184 = vmatpush1.xpose.msra.mxu0 %v166
    %185 = vmatprep.subr.mxu0 0.0
    %186 = vmatpush1.xpose.msra.mxu0 %v167
    %187 = vmatprep.subr.mxu0 0.0
    %188 = vmatpush1.xpose.msra.mxu0 %v168
    %189 = vmatprep.subr.mxu0 0.0
    %190 = vmatpush1.xpose.msra.mxu0 %v169
    %191 = vmatprep.subr.mxu0 0.0
    %192 = vmatpush1.xpose.msra.mxu0 %v170
    %193 = vmatprep.subr.mxu0 0.0
    %194 = vmatpush1.xpose.msra.mxu0 %v171
    %195 = vmatprep.subr.mxu0 0.0
    %196 = vmatpush1.xpose.msra.mxu0 %v172
    %197 = vmatprep.subr.mxu0 0.0
    %198 = vmatpush1.xpose.msra.mxu0 %v173
    %199 = vmatprep.subr.mxu0 0.0
    %200 = vmatpush1.xpose.msra.mxu0 %v174
    %201 = vmatprep.subr.mxu0 0.0
    %202 = vmatpush1.xpose.msra.mxu0 %v175
    %203 = vmatprep.subr.mxu0 0.0
    %204 = vmatpush1.xpose.msra.mxu0 %v176
    %205 = vmatprep.subr.mxu0 0.0
    %206 = vmatpush1.xpose.msra.mxu0 %v177
    %207 = vmatprep.subr.mxu0 0.0
    %208 = vmatpush1.xpose.msra.mxu0 %v178
    %209 = vmatprep.subr.mxu0 0.0
    %210 = vmatpush1.xpose.msra.mxu0 %v179
    %211 = vmatprep.subr.mxu0 0.0
    %212 = vmatpush1.xpose.msra.mxu0 %v180
    %213 = vmatprep.subr.mxu0 0.0
    %214 = vmatpush1.xpose.msra.mxu0 0.0
    %215 = vmatprep.subr.mxu0 0.0
    %216 = vmatpush1.xpose.msra.mxu0 0.0
    %217 = vmatprep.subr.mxu0 0.0
    %218 = vmatpush1.xpose.msra.mxu0 0.0
    %219 = vmatprep.subr.mxu0 0.0
    %220 = vmatpush1.xpose.msra.mxu0 0.0
    %221 = vmatprep.subr.mxu0 0.0
    %222 = vmatpush1.xpose.msra.mxu0 0.0
    %223 = vmatprep.subr.mxu0 0.0
    %224 = vmatpush1.xpose.msra.mxu0 0.0
    %225 = vmatprep.subr.mxu0 0.0
    %226 = vmatpush1.xpose.msra.mxu0 0.0
    %227 = vmatprep.subr.mxu0 0.0
    %228 = vmatpush1.xpose.msra.mxu0 0.0
    %229 = vmatprep.subr.mxu0 0.0
    %230 = vmatpush1.xpose.msra.mxu0 0.0
    %231 = vmatprep.subr.mxu0 0.0
    %232 = vmatpush1.xpose.msra.mxu0 0.0
    %233 = vmatprep.subr.mxu0 0.0
    %234 = vmatpush1.xpose.msra.mxu0 0.0
    %235 = vmatprep.subr.mxu0 0.0
    %236 = vmatpush1.xpose.msra.mxu0 0.0
    %237 = vmatprep.subr.mxu0 0.0
    %238 = vmatpush1.xpose.msra.mxu0 0.0
    %239 = vmatprep.subr.mxu0 0.0
    %240 = vmatpush1.xpose.msra.mxu0 0.0
    %241 = vmatprep.subr.mxu0 0.0
    %242 = vmatpush1.xpose.msra.mxu0 0.0
    %243 = vmatprep.subr.mxu0 0.0
    %244 = vmatpush1.xpose.msra.mxu0 0.0
    %245 = vmatprep.mubr.f32.mxu0 0.0
    %246 = vmatmul.mubr.f32.gmra.mrb[0].mxu0 %v74
    %v247 = vpop.f32.mrb[0].mxu0
    %v248 = vadd.f32 0.0, %v247
    %v249 = vpop.f32.mrb[0].mxu0
    %250 = vdwg.mxu0
    %v251 = vadd.f32 %v164, %v248
    %252 = vst [vmem:[#allocation3] sm:$0xff] %v251
    // Predicated region
    $region38: #{tpu_custom_call.1} parent=1 // pred_check
      %p253 = pneg %p60
    $region39: #{tpu_custom_call.1} parent=1 // pred_check_branch
      %255 = sbr.rel (%p253) target = $region41
    $region40: #{tpu_custom_call.1} parent=1 // pred_region
      %v256 = vld [vmem:[%s4] sm:$0x1]
      %v257 = vld [vmem:[%s4 + $0x1] sm:$0x1]
      %v258 = vld [vmem:[#allocation2] sm:$0xff]
      %v259 = vld [vmem:[#allocation3] sm:$0xff]
      %v260 = vlaneseq
      %v261 = vshrl.u32 %v260, 7
      %v262 = vsub.s32 0, %v261
      %v263 = vrot.slane %v257, %v262
      %v264 = vmul.f32 %v259, %v263
      %v265 = vadd.f32 %v258, %v264
      %v266 = vlaneseq
      %v267 = vshrl.u32 %v266, 7
      %v268 = vsub.s32 0, %v267
      %v269 = vrot.slane %v256, %v268
      %v270 = vadd.f32 %v265, %v269
      %271 = vst [vmem:[#allocation10] sm:$0xff] %v270
    $region41: #{tpu_custom_call.1} parent=1 // pred_fallthru
      _
    // Predicated region
    $region42: #{tpu_custom_call.1} parent=1 // pred_check
      _
    $region43: #{tpu_custom_call.1} parent=1 // pred_check_branch
      %273 = sbr.rel (0) target = $region45
    $region44: #{tpu_custom_call.1} parent=1 // pred_region
      %s275 = ssub.s32 128, 128
      %276 = vsyncadd [#allocation6], %s275
      %s278 = sshll.u32 [#allocation10], 4
      %s279 = int_to_ptr.vmem [resolvable:$true] %s278
      %281 = dma.vmem_to_hbm [thread:$0]  %s279, 128, %s5, [#allocation6]
    $region45: #{tpu_custom_call.1} parent=1 // pred_fallthru
      _
    // Predicated region
    $region46: #{tpu_custom_call.1} parent=1 // pred_check
      _
    $region47: #{tpu_custom_call.1} parent=1 // pred_check_branch
      %283 = sbr.rel (0) target = $region49
    $region48: #{tpu_custom_call.1} parent=1 // pred_region
      %284 = dma.done [#allocation6], 128
    $region49: #{tpu_custom_call.1} parent=1 // pred_fallthru
      _
    %285 = vsyncpa [#allocation5], 1
    %286 = vsyncpa [#allocation8], 1
    %287 = vsyncpa [#allocation6], 1

</llo_original>
